<compile_context>
chip_gen: v7x
topology: tpu7x:2x2x1
jax: 0.10.0
libtpu: 0.0.40
codegen_flags: <defaults>
</compile_context>

<pallas_src>
import jax
import jax.numpy as jnp
from jax import lax
from jax.experimental import pallas as pl
from jax.experimental.pallas import tpu as pltpu

F8_MAX = float(jnp.finfo(jnp.float8_e4m3fn).max)  # 448.0


# ----------------------------- device / tiling helpers -----------------------------
def _device_kind():
    try:
        return jax.devices()[0].device_kind.lower()
    except Exception:
        return ""


def _mxu_supports_fp8():
    k = _device_kind()
    return ("v7" in k) or ("tpu7" in k)


def _is_v5e():
    k = _device_kind()
    return ("v5e" in k) or ("v5 lite" in k) or ("v5lite" in k)


def _default_tiles():
    # (tm, tn, tk) preferred tile sizes. v5e: 1 vst slot / 4x128 MXU -> keep N tile modest.
    if _is_v5e():
        return 512, 256, 512
    return 512, 512, 512


def _pick_tile(dim, preferred, align):
    """Largest multiple of `align` that divides `dim` and is <= preferred, else full dim."""
    if dim <= preferred:
        return dim
    t = (preferred // align) * align
    while t >= align:
        if dim % t == 0:
            return t
        t -= align
    return dim


# ----------------------------- fp8 quantization glue -----------------------------
def _to_fp8(x):
    """Emulates train.py::_to_fp8 — returns (fp8 values, reciprocal scale)."""
    xf = x.astype(jnp.float32)
    amax = jnp.maximum(jnp.max(jnp.abs(xf)), 1e-12)
    scale = F8_MAX / amax
    x_f8 = jnp.clip(xf * scale, -F8_MAX, F8_MAX).astype(jnp.float8_e4m3fn)
    return x_f8, (1.0 / scale).astype(jnp.float32)


def _quantize_with_amax(x, amax):
    """Quantize with a precomputed global abs-max (skips the extra HBM reduction pass)."""
    amax = jnp.maximum(amax.astype(jnp.float32), 1e-12)
    scale = F8_MAX / amax
    x_f8 = jnp.clip(x.astype(jnp.float32) * scale, -F8_MAX, F8_MAX).astype(jnp.float8_e4m3fn)
    return x_f8, (1.0 / scale).astype(jnp.float32)


def _as_mxu_operand(x_f8):
    # v7x MXU eats fp8 natively; v5e/v6e carry the exact e4m3 values in bf16.
    return x_f8 if _mxu_supports_fp8() else x_f8.astype(jnp.bfloat16)


# ----------------------------- kernel 1: c_fc + split + SiLU gate -----------------------------
def _fc_silu_gate_kernel(scale_ref, x_ref, wa_ref, wb_ref, o_ref, amax_ref, acc_a, acc_b):
    k = pl.program_id(2)

    @pl.when(k == 0)
    def _():
        acc_a[...] = jnp.zeros_like(acc_a)
        acc_b[...] = jnp.zeros_like(acc_b)

    x = x_ref[...]
    # Weights are in natural (out, in) layout -> contract dim 1 of both operands ("NT" matmul).
    dn = (((1,), (1,)), ((), ()))
    acc_a[...] += lax.dot_general(x, wa_ref[...], dn, preferred_element_type=jnp.float32)
    acc_b[...] += lax.dot_general(x, wb_ref[...], dn, preferred_element_type=jnp.float32)

    @pl.when(k == pl.num_programs(2) - 1)
    def _():
        s = scale_ref[0]                       # combined dequant scale x_inv * w_inv
        a = acc_a[...] * s                     # f32, no bf16 round trips
        b = acc_b[...] * s
        g = (a * jax.nn.sigmoid(a)) * b        # SiLU(a) * b in f32
        g_bf = g.astype(o_ref.dtype)
        o_ref[...] = g_bf
        tile_amax = jnp.max(jnp.abs(g_bf.astype(jnp.float32)))
        amax_ref[...] = jnp.full(amax_ref.shape, tile_amax, dtype=jnp.float32)


def fp8_fc_silu_gate(x2d, w_fc, *, tm, tn, tk):
    """x2d: (M, E); w_fc: (8E, E) in natural nn.Linear layout.
    Returns (SiLU(h[:, :4E]) * h[:, 4E:]  bf16, per-tile absmax of that output)."""
    M, E = x2d.shape
    H8, E2 = w_fc.shape
    assert E2 == E
    H4 = H8 // 2
    assert M % tm == 0 and H4 % tn == 0 and E % tk == 0, (M, H4, E, tm, tn, tk)

    x_f8, x_inv = _to_fp8(x2d)
    w_f8, w_inv = _to_fp8(w_fc)
    x_q = _as_mxu_operand(x_f8)
    w_q = _as_mxu_operand(w_f8)                # natural layout, no transpose / slices in HBM
    scale = jnp.reshape(x_inv * w_inv, (1,))

    gm, gn, gk = M // tm, H4 // tn, E // tk
    nb_j = gn                                  # block-row offset of the gate half of W_fc

    bpe = x_q.dtype.itemsize
    cost = pl.CostEstimate(
        flops=4 * M * H4 * E,                  # two matmuls
        transcendentals=M * H4,                # sigmoid
        bytes_accessed=M * E * bpe + H8 * E * bpe + M * H4 * 2 + gm * gn * 8 * 128 * 4,
    )

    gated, amax_tiles = pl.pallas_call(
        _fc_silu_gate_kernel,
        out_shape=(
            jax.ShapeDtypeStruct((M, H4), jnp.bfloat16),
            jax.ShapeDtypeStruct((gm * 8, gn * 128), jnp.float32),
        ),
        grid_spec=pltpu.PrefetchScalarGridSpec(
            num_scalar_prefetch=0,
            grid=(gm, gn, gk),
            in_specs=[
                pl.BlockSpec(memory_space=pltpu.MemorySpace.SMEM),        # scale (1,)
                pl.BlockSpec((tm, tk), lambda i, j, k: (i, k)),           # x
                pl.BlockSpec((tn, tk), lambda i, j, k: (j, k)),           # W_fc rows [0, 4E)
                pl.BlockSpec((tn, tk), lambda i, j, k: (j + nb_j, k)),    # W_fc rows [4E, 8E)
            ],
            out_specs=[
                pl.BlockSpec((tm, tn), lambda i, j, k: (i, j)),           # gated activation
                pl.BlockSpec((8, 128), lambda i, j, k: (i, j)),           # per-tile absmax
            ],
            scratch_shapes=[pltpu.VMEM((tm, tn), jnp.float32),
                            pltpu.VMEM((tm, tn), jnp.float32)],
        ),
        compiler_params=pltpu.CompilerParams(
            dimension_semantics=("parallel", "parallel", "arbitrary"),
            vmem_limit_bytes=48 * 1024 * 1024),
        cost_estimate=cost,
    )(scale, x_q, w_q, w_q)                    # same weight buffer passed twice (no HBM copies)

    return gated, jnp.max(amax_tiles)


# ----------------------------- kernel 2: c_proj -----------------------------
def _proj_kernel(scale_ref, h_ref, w_ref, o_ref, acc):
    k = pl.program_id(2)

    @pl.when(k == 0)
    def _():
        acc[...] = jnp.zeros_like(acc)

    dn = (((1,), (1,)), ((), ()))
    acc[...] += lax.dot_general(h_ref[...], w_ref[...], dn, preferred_element_type=jnp.float32)

    @pl.when(k == pl.num_programs(2) - 1)
    def _():
        o_ref[...] = (acc[...] * scale_ref[0]).astype(o_ref.dtype)


def fp8_linear(x2d, w, *, tm, tn, tk, x_amax=None):
    """FP8Linear forward: x2d (M, K), w (O, K) natural layout -> (M, O) bf16."""
    M, K = x2d.shape
    O, K2 = w.shape
    assert K2 == K
    assert M % tm == 0 and O % tn == 0 and K % tk == 0, (M, O, K, tm, tn, tk)

    if x_amax is None:
        x_f8, x_inv = _to_fp8(x2d)
    else:
        # abs-max was produced by the previous kernel -> single fused scale/clamp/cast pass.
        # TODO(synk): fold this quantization into the kernel load path once native fp8 casts
        # are available in Mosaic on pre-v7x generations.
        x_f8, x_inv = _quantize_with_amax(x2d, x_amax)
    w_f8, w_inv = _to_fp8(w)
    x_q = _as_mxu_operand(x_f8)
    w_q = _as_mxu_operand(w_f8)                # natural (O, K), no transpose in HBM
    scale = jnp.reshape(x_inv * w_inv, (1,))

    bpe = x_q.dtype.itemsize
    cost = pl.CostEstimate(
        flops=2 * M * O * K,
        transcendentals=0,
        bytes_accessed=M * K * bpe + O * K * bpe + M * O * 2,
    )

    return pl.pallas_call(
        _proj_kernel,
        out_shape=jax.ShapeDtypeStruct((M, O), jnp.bfloat16),
        grid_spec=pltpu.PrefetchScalarGridSpec(
            num_scalar_prefetch=0,
            grid=(M // tm, O // tn, K // tk),
            in_specs=[
                pl.BlockSpec(memory_space=pltpu.MemorySpace.SMEM),        # scale (1,)
                pl.BlockSpec((tm, tk), lambda i, j, k: (i, k)),           # activations
                pl.BlockSpec((tn, tk), lambda i, j, k: (j, k)),           # W_proj (natural)
            ],
            out_specs=pl.BlockSpec((tm, tn), lambda i, j, k: (i, j)),
            scratch_shapes=[pltpu.VMEM((tm, tn), jnp.float32)],
        ),
        compiler_params=pltpu.CompilerParams(
            dimension_semantics=("parallel", "parallel", "arbitrary"),
            vmem_limit_bytes=48 * 1024 * 1024),
        cost_estimate=cost,
    )(scale, x_q, w_q)


# ----------------------------- MLP forward -----------------------------
def mlp_forward(x, w_fc, w_proj):
    """x: (B, T, E) bf16.  w_fc: (8E, E).  w_proj: (E, 4E).  Returns (B, T, E) bf16."""
    B, T, E = x.shape
    M = B * T
    H8 = w_fc.shape[0]
    H4 = H8 // 2
    x2d = x.reshape(M, E)

    tm_p, tn_p, tk_p = _default_tiles()
    # kernel 1 tiles: (8,128)-aligned or full-dim fallback (small shapes)
    tm1 = _pick_tile(M, tm_p, 8)
    tn1 = _pick_tile(H4, tn_p, 128)
    tk1 = _pick_tile(E, tk_p, 128)
    gated, g_amax = fp8_fc_silu_gate(x2d, w_fc, tm=tm1, tn=tn1, tk=tk1)

    # kernel 2 tiles
    tm2 = _pick_tile(M, tm_p, 8)
    tn2 = _pick_tile(E, tn_p, 128)
    tk2 = _pick_tile(H4, tk_p, 128)
    y2d = fp8_linear(gated, w_proj, tm=tm2, tn=tn2, tk=tk2, x_amax=g_amax)
    return y2d.reshape(B, T, E)


mlp_forward = jax.jit(mlp_forward)

# NOTE: only the forward pass is implemented; _FP8Matmul.backward / DDP are out of scope.


# ----------------------------- pure-JAX references -----------------------------
def mlp_reference(x, w_fc, w_proj):
    """Faithful emulation of the PyTorch module (bf16 intermediates, as torch does)."""
    B, T, E = x.shape
    x2d = x.reshape(-1, E)

    def fp8_mm(a, w):
        a_f8, a_inv = _to_fp8(a)
        w_f8, w_inv = _to_fp8(w)
        y = jnp.dot(a_f8.astype(jnp.float32), w_f8.astype(jnp.float32).T) * (a_inv * w_inv)
        return y.astype(jnp.bfloat16)

    h = fp8_mm(x2d, w_fc)
    a, b = h[:, :4 * E], h[:, 4 * E:]
    a32 = a.astype(jnp.float32)
    a = (a32 * jax.nn.sigmoid(a32)).astype(jnp.bfloat16)
    y2d = fp8_mm(a * b, w_proj)
    return y2d.reshape(B, T, E)


def mlp_reference_kernel_math(x, w_fc, w_proj):
    """Pure-JAX replica of the exact math the Pallas pipeline performs (f32 epilogue)."""
    B, T, E = x.shape
    x2d = x.reshape(-1, E)
    x_f8, x_inv = _to_fp8(x2d)
    wf_f8, wf_inv = _to_fp8(w_fc)
    h = jnp.dot(x_f8.astype(jnp.float32), wf_f8.astype(jnp.float32).T) * (x_inv * wf_inv)
    a, b = h[:, :4 * E], h[:, 4 * E:]
    g_bf = ((a * jax.nn.sigmoid(a)) * b).astype(jnp.bfloat16)
    amax = jnp.max(jnp.abs(g_bf.astype(jnp.float32)))
    g_f8, g_inv = _quantize_with_amax(g_bf, amax)
    wp_f8, wp_inv = _to_fp8(w_proj)
    y = jnp.dot(g_f8.astype(jnp.float32), wp_f8.astype(jnp.float32).T) * (g_inv * wp_inv)
    return y.astype(jnp.bfloat16).reshape(B, T, E)


# ----------------------------- test -----------------------------
if __name__ == "__main__":
    def run_case(B, T, n_embd, seed):
        key = jax.random.PRNGKey(seed)
        kx, kw1, kw2 = jax.random.split(key, 3)
        # deterministic trunc_normal(std=0.02) init, matching FP8Linear.__init__
        w_fc = 0.02 * jax.random.truncated_normal(kw1, -2.0, 2.0, (8 * n_embd, n_embd), jnp.float32)
        w_proj = 0.02 * jax.random.truncated_normal(kw2, -2.0, 2.0, (n_embd, 4 * n_embd), jnp.float32)
        x = jax.random.normal(kx, (B, T, n_embd), jnp.float32).astype(jnp.bfloat16)
        out = jax.block_until_ready(mlp_forward(x, w_fc, w_proj))
        return x, w_fc, w_proj, out

    # --- test 1: small shapes, compare against the torch-faithful fp8 reference ---
    x, w_fc, w_proj, out = run_case(2, 8, 32, 0)
    assert out.shape == (2, 8, 32) and out.dtype == jnp.bfloat16
    assert jnp.all(jnp.isfinite(out.astype(jnp.float32)))
    ref = jax.block_until_ready(mlp_reference(x, w_fc, w_proj))
    assert jnp.allclose(out.astype(jnp.float32), ref.astype(jnp.float32), rtol=5e-2, atol=1.5e-3)

    # --- test 2: larger shapes exercising multi-tile grid + K-axis accumulation ---
    x, w_fc, w_proj, out = run_case(4, 128, 256, 1)
    assert out.shape == (4, 128, 256) and out.dtype == jnp.bfloat16
    assert jnp.all(jnp.isfinite(out.astype(jnp.float32)))
    ref2 = jax.block_until_ready(mlp_reference_kernel_math(x, w_fc, w_proj))
    assert jnp.allclose(out.astype(jnp.float32), ref2.astype(jnp.float32), rtol=5e-2, atol=2e-3)

    print("KERNEL_OK")
</pallas_src>

<mosaic_0001>
module attributes {stable_mosaic.version = 11 : i64} {
  func.func @_fc_silu_gate_kernel(%arg0: i32, %arg1: i32, %arg2: i32, %arg3: memref<1xf32, #tpu.memory_space<smem>>, %arg4: memref<16x32xbf16, #tpu.memory_space<vmem>>, %arg5: memref<128x32xbf16, #tpu.memory_space<vmem>>, %arg6: memref<128x32xbf16, #tpu.memory_space<vmem>>, %arg7: memref<16x128xbf16, #tpu.memory_space<vmem>>, %arg8: memref<8x128xf32, #tpu.memory_space<vmem>>, %arg9: memref<16x128xf32, #tpu.memory_space<vmem>>, %arg10: memref<16x128xf32, #tpu.memory_space<vmem>>) attributes {dimension_semantics = [#tpu.dimension_semantics<parallel>, #tpu.dimension_semantics<parallel>, #tpu.dimension_semantics<arbitrary>], iteration_bounds = array<i64: 1, 1, 1>, scalar_prefetch = 0 : i64, scratch_operands = 2 : i64, tpu.core_type = #tpu.core_type<tc>, window_params = [{transform_indices = @transform_0, window_bounds = array<i64: 1>}, {transform_indices = @transform_1, window_bounds = array<i64: 16, 32>}, {transform_indices = @transform_2, window_bounds = array<i64: 128, 32>}, {transform_indices = @transform_3, window_bounds = array<i64: 128, 32>}, {transform_indices = @transform_4, window_bounds = array<i64: 16, 128>}, {transform_indices = @transform_5, window_bounds = array<i64: 8, 128>}]} {
    %c0_i32 = arith.constant 0 : i32
    %0 = arith.cmpi eq, %arg2, %c0_i32 : i32
    %1 = arith.extui %0 : i1 to i32
    %c0_i32_0 = arith.constant 0 : i32
    %2 = arith.cmpi ne, %1, %c0_i32_0 : i32
    scf.if %2 {
      %cst_17 = arith.constant 0.000000e+00 : f32
      %17 = vector.broadcast %cst_17 : f32 to vector<16x128xf32>
      %c0_18 = arith.constant 0 : index
      %c0_19 = arith.constant 0 : index
      %18 = vector.load %arg9[%c0_18, %c0_19] : memref<16x128xf32, #tpu.memory_space<vmem>>, vector<16x128xf32>
      tpu.vector_store %arg9[%c0_18, %c0_19], %17 {strides = array<i32>} : memref<16x128xf32, #tpu.memory_space<vmem>>, vector<16x128xf32>,
      %cst_20 = arith.constant 0.000000e+00 : f32
      %19 = vector.broadcast %cst_20 : f32 to vector<16x128xf32>
      %c0_21 = arith.constant 0 : index
      %c0_22 = arith.constant 0 : index
      %20 = vector.load %arg10[%c0_21, %c0_22] : memref<16x128xf32, #tpu.memory_space<vmem>>, vector<16x128xf32>
      tpu.vector_store %arg10[%c0_21, %c0_22], %19 {strides = array<i32>} : memref<16x128xf32, #tpu.memory_space<vmem>>, vector<16x128xf32>,
    } else {
    }
    %c0 = arith.constant 0 : index
    %c0_1 = arith.constant 0 : index
    %3 = vector.load %arg4[%c0, %c0_1] : memref<16x32xbf16, #tpu.memory_space<vmem>>, vector<16x32xbf16>
    %c0_2 = arith.constant 0 : index
    %c0_3 = arith.constant 0 : index
    %4 = vector.load %arg9[%c0_2, %c0_3] : memref<16x128xf32, #tpu.memory_space<vmem>>, vector<16x128xf32>
    %c0_4 = arith.constant 0 : index
    %c0_5 = arith.constant 0 : index
    %5 = vector.load %arg5[%c0_4, %c0_5] : memref<128x32xbf16, #tpu.memory_space<vmem>>, vector<128x32xbf16>
    %cst = arith.constant dense<0.000000e+00> : vector<16x128xf32>
    %6 = tpu.matmul %3, %5, %cst {dimension_numbers = #tpu.dot_dimension_numbers<[1], [1], [0], [0], [0, 0, 1, 0], [], []>} : vector<16x32xbf16>, vector<128x32xbf16>, vector<16x128xf32> -> vector<16x128xf32>
    %7 = arith.addf %4, %6 : vector<16x128xf32>
    %c0_6 = arith.constant 0 : index
    %c0_7 = arith.constant 0 : index
    %8 = vector.load %arg9[%c0_6, %c0_7] : memref<16x128xf32, #tpu.memory_space<vmem>>, vector<16x128xf32>
    tpu.vector_store %arg9[%c0_6, %c0_7], %7 {strides = array<i32>} : memref<16x128xf32, #tpu.memory_space<vmem>>, vector<16x128xf32>,
    %c0_8 = arith.constant 0 : index
    %c0_9 = arith.constant 0 : index
    %9 = vector.load %arg10[%c0_8, %c0_9] : memref<16x128xf32, #tpu.memory_space<vmem>>, vector<16x128xf32>
    %c0_10 = arith.constant 0 : index
    %c0_11 = arith.constant 0 : index
    %10 = vector.load %arg6[%c0_10, %c0_11] : memref<128x32xbf16, #tpu.memory_space<vmem>>, vector<128x32xbf16>
    %cst_12 = arith.constant dense<0.000000e+00> : vector<16x128xf32>
    %11 = tpu.matmul %3, %10, %cst_12 {dimension_numbers = #tpu.dot_dimension_numbers<[1], [1], [0], [0], [0, 0, 1, 0], [], []>} : vector<16x32xbf16>, vector<128x32xbf16>, vector<16x128xf32> -> vector<16x128xf32>
    %12 = arith.addf %9, %11 : vector<16x128xf32>
    %c0_13 = arith.constant 0 : index
    %c0_14 = arith.constant 0 : index
    %13 = vector.load %arg10[%c0_13, %c0_14] : memref<16x128xf32, #tpu.memory_space<vmem>>, vector<16x128xf32>
    tpu.vector_store %arg10[%c0_13, %c0_14], %12 {strides = array<i32>} : memref<16x128xf32, #tpu.memory_space<vmem>>, vector<16x128xf32>,
    %c0_i32_15 = arith.constant 0 : i32
    %14 = arith.cmpi eq, %arg2, %c0_i32_15 : i32
    %15 = arith.extui %14 : i1 to i32
    %c0_i32_16 = arith.constant 0 : i32
    %16 = arith.cmpi ne, %15, %c0_i32_16 : i32
    scf.if %16 {
      %c0_17 = arith.constant 0 : index
      %17 = memref.load %arg3[%c0_17] : memref<1xf32, #tpu.memory_space<smem>>
      %c0_18 = arith.constant 0 : index
      %c0_19 = arith.constant 0 : index
      %18 = vector.load %arg9[%c0_18, %c0_19] : memref<16x128xf32, #tpu.memory_space<vmem>>, vector<16x128xf32>
      %19 = vector.broadcast %17 : f32 to vector<16x128xf32>
      %20 = arith.mulf %18, %19 : vector<16x128xf32>
      %c0_20 = arith.constant 0 : index
      %c0_21 = arith.constant 0 : index
      %21 = vector.load %arg10[%c0_20, %c0_21] : memref<16x128xf32, #tpu.memory_space<vmem>>, vector<16x128xf32>
      %22 = vector.broadcast %17 : f32 to vector<16x128xf32>
      %23 = arith.mulf %21, %22 : vector<16x128xf32>
      %24 = arith.negf %20 : vector<16x128xf32>
      %25 = math.exp %24 : vector<16x128xf32>
      %cst_22 = arith.constant 1.000000e+00 : f32
      %26 = vector.broadcast %cst_22 : f32 to vector<16x128xf32>
      %27 = arith.addf %26, %25 : vector<16x128xf32>
      %28 = arith.divf %26, %27 : vector<16x128xf32>
      %29 = arith.mulf %20, %28 : vector<16x128xf32>
      %30 = arith.mulf %29, %23 : vector<16x128xf32>
      %31 = arith.truncf %30 : vector<16x128xf32> to vector<16x128xbf16>
      %c0_23 = arith.constant 0 : index
      %c0_24 = arith.constant 0 : index
      %32 = vector.load %arg7[%c0_23, %c0_24] : memref<16x128xbf16, #tpu.memory_space<vmem>>, vector<16x128xbf16>
      tpu.vector_store %arg7[%c0_23, %c0_24], %31 {strides = array<i32>} : memref<16x128xbf16, #tpu.memory_space<vmem>>, vector<16x128xbf16>,
      %33 = arith.extf %31 : vector<16x128xbf16> to vector<16x128xf32>
      %34 = math.absf %33 : vector<16x128xf32>
      %35 = vector.shape_cast %34 : vector<16x128xf32> to vector<1x16x128xf32>
      %cst_25 = arith.constant dense<0xFF800000> : vector<1xf32>
      %36 = vector.multi_reduction <maximumf>, %35, %cst_25 [1, 2] : vector<1x16x128xf32> to vector<1xf32>
      %37 = vector.shape_cast %36 : vector<1xf32> to vector<1x1x1xf32>
      %38 = vector.extract %37[0, 0, 0] : f32 from vector<1x1x1xf32>
      %39 = vector.broadcast %38 : f32 to vector<8x128xf32>
      %c0_26 = arith.constant 0 : index
      %c0_27 = arith.constant 0 : index
      %40 = vector.load %arg8[%c0_26, %c0_27] : memref<8x128xf32, #tpu.memory_space<vmem>>, vector<8x128xf32>
      tpu.vector_store %arg8[%c0_26, %c0_27], %39 {strides = array<i32>} : memref<8x128xf32, #tpu.memory_space<vmem>>, vector<8x128xf32>,
    } else {
    }
    return
  }
  func.func @transform_0(%arg0: i32, %arg1: i32, %arg2: i32) -> i32 {
    %c0_i32 = arith.constant 0 : i32
    %c0_i32_0 = arith.constant 0 : i32
    return %c0_i32 : i32
  }
  func.func @transform_1(%arg0: i32, %arg1: i32, %arg2: i32) -> (i32, i32) {
    %c0_i32 = arith.constant 0 : i32
    return %arg0, %arg2 : i32, i32
  }
  func.func @transform_2(%arg0: i32, %arg1: i32, %arg2: i32) -> (i32, i32) {
    %c0_i32 = arith.constant 0 : i32
    return %arg1, %arg2 : i32, i32
  }
  func.func @transform_3(%arg0: i32, %arg1: i32, %arg2: i32) -> (i32, i32) {
    %c1_i32 = arith.constant 1 : i32
    %0 = arith.addi %arg1, %c1_i32 : i32
    %c0_i32 = arith.constant 0 : i32
    return %0, %arg2 : i32, i32
  }
  func.func @transform_4(%arg0: i32, %arg1: i32, %arg2: i32) -> (i32, i32) {
    %c0_i32 = arith.constant 0 : i32
    return %arg0, %arg1 : i32, i32
  }
  func.func @transform_5(%arg0: i32, %arg1: i32, %arg2: i32) -> (i32, i32) {
    %c0_i32 = arith.constant 0 : i32
    return %arg0, %arg1 : i32, i32
  }
}

module attributes {stable_mosaic.version = 11 : i64} {
  func.func @_proj_kernel(%arg0: i32, %arg1: i32, %arg2: i32, %arg3: memref<1xf32, #tpu.memory_space<smem>>, %arg4: memref<16x128xbf16, #tpu.memory_space<vmem>>, %arg5: memref<32x128xbf16, #tpu.memory_space<vmem>>, %arg6: memref<16x32xbf16, #tpu.memory_space<vmem>>, %arg7: memref<16x32xf32, #tpu.memory_space<vmem>>) attributes {dimension_semantics = [#tpu.dimension_semantics<parallel>, #tpu.dimension_semantics<parallel>, #tpu.dimension_semantics<arbitrary>], iteration_bounds = array<i64: 1, 1, 1>, scalar_prefetch = 0 : i64, scratch_operands = 1 : i64, tpu.core_type = #tpu.core_type<tc>, window_params = [{transform_indices = @transform_0, window_bounds = array<i64: 1>}, {transform_indices = @transform_1, window_bounds = array<i64: 16, 128>}, {transform_indices = @transform_2, window_bounds = array<i64: 32, 128>}, {transform_indices = @transform_3, window_bounds = array<i64: 16, 32>}]} {
    %c0_i32 = arith.constant 0 : i32
    %0 = arith.cmpi eq, %arg2, %c0_i32 : i32
    %1 = arith.extui %0 : i1 to i32
    %c0_i32_0 = arith.constant 0 : i32
    %2 = arith.cmpi ne, %1, %c0_i32_0 : i32
    scf.if %2 {
      %cst_10 = arith.constant 0.000000e+00 : f32
      %12 = vector.broadcast %cst_10 : f32 to vector<16x32xf32>
      %c0_11 = arith.constant 0 : index
      %c0_12 = arith.constant 0 : index
      %13 = vector.load %arg7[%c0_11, %c0_12] : memref<16x32xf32, #tpu.memory_space<vmem>>, vector<16x32xf32>
      tpu.vector_store %arg7[%c0_11, %c0_12], %12 {strides = array<i32>} : memref<16x32xf32, #tpu.memory_space<vmem>>, vector<16x32xf32>,
    } else {
    }
    %c0 = arith.constant 0 : index
    %c0_1 = arith.constant 0 : index
    %3 = vector.load %arg7[%c0, %c0_1] : memref<16x32xf32, #tpu.memory_space<vmem>>, vector<16x32xf32>
    %c0_2 = arith.constant 0 : index
    %c0_3 = arith.constant 0 : index
    %4 = vector.load %arg4[%c0_2, %c0_3] : memref<16x128xbf16, #tpu.memory_space<vmem>>, vector<16x128xbf16>
    %c0_4 = arith.constant 0 : index
    %c0_5 = arith.constant 0 : index
    %5 = vector.load %arg5[%c0_4, %c0_5] : memref<32x128xbf16, #tpu.memory_space<vmem>>, vector<32x128xbf16>
    %cst = arith.constant dense<0.000000e+00> : vector<16x32xf32>
    %6 = tpu.matmul %4, %5, %cst {dimension_numbers = #tpu.dot_dimension_numbers<[1], [1], [0], [0], [0, 0, 1, 0], [], []>} : vector<16x128xbf16>, vector<32x128xbf16>, vector<16x32xf32> -> vector<16x32xf32>
    %7 = arith.addf %3, %6 : vector<16x32xf32>
    %c0_6 = arith.constant 0 : index
    %c0_7 = arith.constant 0 : index
    %8 = vector.load %arg7[%c0_6, %c0_7] : memref<16x32xf32, #tpu.memory_space<vmem>>, vector<16x32xf32>
    tpu.vector_store %arg7[%c0_6, %c0_7], %7 {strides = array<i32>} : memref<16x32xf32, #tpu.memory_space<vmem>>, vector<16x32xf32>,
    %c0_i32_8 = arith.constant 0 : i32
    %9 = arith.cmpi eq, %arg2, %c0_i32_8 : i32
    %10 = arith.extui %9 : i1 to i32
    %c0_i32_9 = arith.constant 0 : i32
    %11 = arith.cmpi ne, %10, %c0_i32_9 : i32
    scf.if %11 {
      %c0_10 = arith.constant 0 : index
      %c0_11 = arith.constant 0 : index
      %12 = vector.load %arg7[%c0_10, %c0_11] : memref<16x32xf32, #tpu.memory_space<vmem>>, vector<16x32xf32>
      %c0_12 = arith.constant 0 : index
      %13 = memref.load %arg3[%c0_12] : memref<1xf32, #tpu.memory_space<smem>>
      %14 = vector.broadcast %13 : f32 to vector<16x32xf32>
      %15 = arith.mulf %12, %14 : vector<16x32xf32>
      %16 = arith.truncf %15 : vector<16x32xf32> to vector<16x32xbf16>
      %c0_13 = arith.constant 0 : index
      %c0_14 = arith.constant 0 : index
      %17 = vector.load %arg6[%c0_13, %c0_14] : memref<16x32xbf16, #tpu.memory_space<vmem>>, vector<16x32xbf16>
      tpu.vector_store %arg6[%c0_13, %c0_14], %16 {strides = array<i32>} : memref<16x32xbf16, #tpu.memory_space<vmem>>, vector<16x32xbf16>,
    } else {
    }
    return
  }
  func.func @transform_0(%arg0: i32, %arg1: i32, %arg2: i32) -> i32 {
    %c0_i32 = arith.constant 0 : i32
    %c0_i32_0 = arith.constant 0 : i32
    return %c0_i32 : i32
  }
  func.func @transform_1(%arg0: i32, %arg1: i32, %arg2: i32) -> (i32, i32) {
    %c0_i32 = arith.constant 0 : i32
    return %arg0, %arg2 : i32, i32
  }
  func.func @transform_2(%arg0: i32, %arg1: i32, %arg2: i32) -> (i32, i32) {
    %c0_i32 = arith.constant 0 : i32
    return %arg1, %arg2 : i32, i32
  }
  func.func @transform_3(%arg0: i32, %arg1: i32, %arg2: i32) -> (i32, i32) {
    %c0_i32 = arith.constant 0 : i32
    return %arg0, %arg1 : i32, i32
  }
}

</mosaic_0001>

<llo_original>
// kernel: mlp_forward.3
$region0: #{mlp_forward.3}
  #allocation0 [shape = 'u32[]', space=smem, size = 0x4, offset = 0x4, fixed_abs, tag = 'smem constant byte address 0x4 - core index']
  #allocation1 [shape = 'u32[144,128]{1,0:T(1,128)}', space=vmem, size = 0x12000, scoped, tag = 'internal scratch']
  #allocation2 [shape = 'f32[16,32]{1,0:T(8,128)}', space=vmem, size = 0x2000, scoped, tag = 'scratch operand']
  #allocation3 [shape = 'f32[1]{0:T(128)S(6)}', space=smem, size = 0x200, scoped, tag = 'scoped memory for mlp_forward.3']
  %s0 = inlined_call_operand.<no memory space> [shape: f32[1], index: 0, kind: input, shape index: {}]
  %s1 = inlined_call_operand.vmem [shape: bf16[16,128], index: 1, kind: input, shape index: {}]
  %s2 = inlined_call_operand.vmem [shape: bf16[32,128], index: 2, kind: input, shape index: {}]
  %s3 = inlined_call_operand.hbm [shape: bf16[16,32], index: 3, kind: output, shape index: {}]
  %s4 = sld [smem:[#allocation0]]
  $region30: #{mlp_forward.3} parent=0
    _
  %s6 = ssub.s32 1, %s4
  %s7 = scalar_select 0, %s6, %s4
  %8 = sst [smem:[#allocation3]] %s0
  $region1: #{mlp_forward.3} parent=0
    #allocation4 [shape = 'u8[4096]{0}', space=vmem, size = 0x1000, scoped, tag = 'output window, operand 0, single buffered']
    #allocation5 [shape = 's32[1]{0}', space=sflag, size = 0x4, scoped, tag = 'scoped memory for mlp_forward.3']
    %9 = vsyncpa [#allocation5], 0
    // Predicated region
    $region2: #{mlp_forward.3} parent=1 // pred_check
      _
    $region3: #{mlp_forward.3} parent=1 // pred_check_branch
      %11 = sbr.rel (0) target = $region5
    $region4: #{mlp_forward.3} parent=1 // pred_region
      _
    $region5: #{mlp_forward.3} parent=1 // pred_fallthru
      _
    // Predicated region
    $region6: #{mlp_forward.3} parent=1 // pred_check
      _
    $region7: #{mlp_forward.3} parent=1 // pred_check_branch
      %13 = sbr.rel (0) target = $region9
    $region8: #{mlp_forward.3} parent=1 // pred_region
      _
    $region9: #{mlp_forward.3} parent=1 // pred_fallthru
      _
    // Predicated region
    $region10: #{mlp_forward.3} parent=1 // pred_check
      _
    $region11: #{mlp_forward.3} parent=1 // pred_check_branch
      %15 = sbr.rel (0) target = $region13
    $region12: #{mlp_forward.3} parent=1 // pred_region
      _
    $region13: #{mlp_forward.3} parent=1 // pred_fallthru
      _
    %p17 = scmp.eq.s32.totalorder 0, 0
    // Predicated region
    $region14: #{mlp_forward.3} parent=1 // pred_check
      %p18 = pneg %p17
    $region15: #{mlp_forward.3} parent=1 // pred_check_branch
      %20 = sbr.rel (%p18) target = $region17
    $region16: #{mlp_forward.3} parent=1 // pred_region
      %vm21 = vcmask 261120
      %22 = vst.msk [vmem:[#allocation2] sm:$0xff] %vm21, 0.0
      %23 = vst.msk [vmem:[#allocation2 + $0x8] sm:$0xff] %vm21, 0.0
    $region17: #{mlp_forward.3} parent=1 // pred_fallthru
      _
    %v24 = vld [vmem:[#allocation2] sm:$0xff]
    %v25 = vld [vmem:[#allocation2 + $0x8] sm:$0xff]
    %v26 = vld [vmem:[%s1] sm:$0xf]
    %v27 = vld [vmem:[%s1 + $0x4] sm:$0xf]
    %v28 = vld [vmem:[%s2] sm:$0xf]
    %v29 = vld [vmem:[%s2 + $0x4] sm:$0xf]
    %v30 = vld [vmem:[%s2 + $0x8] sm:$0xf]
    %v31 = vld [vmem:[%s2 + $0xc] sm:$0xf]
    %v34 = vunpack.c.l.b16 %v26
    %v35 = vunpack.c.l.b16 %v27
    %v36 = vpack.c.b16 %v35, %v34
    %v42 = vunpack.c.l.b16 %v28
    %v43 = vunpack.c.l.b16 %v29
    %v44 = vunpack.c.l.b16 %v30
    %v45 = vunpack.c.l.b16 %v31
    %v46 = vpack.c.b16 %v43, %v42
    %v47 = vpack.c.b16 %v45, %v44
    %50 = vmatprep.subr.bf16.mxu0 0
    %51 = vmatpush1.bf16.xpose.msra.mxu0 %v46
    %52 = vmatprep.subr.bf16.mxu0 0
    %53 = vmatpush1.bf16.xpose.msra.mxu0 %v47
    %54 = vmatprep.subr.bf16.mxu0 0
    %55 = vmatpush1.bf16.xpose.msra.mxu0 0
    %56 = vmatprep.subr.bf16.mxu0 0
    %57 = vmatpush1.bf16.xpose.msra.mxu0 0
    %58 = vmatprep.subr.bf16.mxu0 0
    %59 = vmatpush1.bf16.xpose.msra.mxu0 0
    %60 = vmatprep.subr.bf16.mxu0 0
    %61 = vmatpush1.bf16.xpose.msra.mxu0 0
    %62 = vmatprep.subr.bf16.mxu0 0
    %63 = vmatpush1.bf16.xpose.msra.mxu0 0
    %64 = vmatprep.subr.bf16.mxu0 0
    %65 = vmatpush1.bf16.xpose.msra.mxu0 0
    %66 = vmatprep.subr.bf16.mxu0 0
    %67 = vmatpush1.bf16.xpose.msra.mxu0 0
    %68 = vmatprep.subr.bf16.mxu0 0
    %69 = vmatpush1.bf16.xpose.msra.mxu0 0
    %70 = vmatprep.subr.bf16.mxu0 0
    %71 = vmatpush1.bf16.xpose.msra.mxu0 0
    %72 = vmatprep.subr.bf16.mxu0 0
    %73 = vmatpush1.bf16.xpose.msra.mxu0 0
    %74 = vmatprep.subr.bf16.mxu0 0
    %75 = vmatpush1.bf16.xpose.msra.mxu0 0
    %76 = vmatprep.subr.bf16.mxu0 0
    %77 = vmatpush1.bf16.xpose.msra.mxu0 0
    %78 = vmatprep.subr.bf16.mxu0 0
    %79 = vmatpush1.bf16.xpose.msra.mxu0 0
    %80 = vmatprep.subr.bf16.mxu0 0
    %81 = vmatpush1.bf16.xpose.msra.mxu0 0
    %82 = vmatprep.mubr.bf16.mxu0 0
    %83 = vmatmul.mubr.bf16.gmra.mrb[0].mxu0 %v36
    %v84 = vpop.f32.mrb[0].mxu0
    %v85 = vadd.f32 0.0, %v84
    %v86 = vpop.f32.mrb[0].mxu0
    %v87 = vpop.f32.mrb[0].mxu0
    %v88 = vadd.f32 0.0, %v87
    %v89 = vpop.f32.mrb[0].mxu0
    %90 = vdwg.mxu0
    %v91 = vadd.f32 %v24, %v85
    %v92 = vadd.f32 %v25, %v88
    %vm93 = vcmask 261120
    %94 = vst.msk [vmem:[#allocation2] sm:$0xff] %vm93, %v91
    %95 = vst.msk [vmem:[#allocation2 + $0x8] sm:$0xff] %vm93, %v92
    // Predicated region
    $region18: #{mlp_forward.3} parent=1 // pred_check
      %p96 = pneg %p17
    $region19: #{mlp_forward.3} parent=1 // pred_check_branch
      %98 = sbr.rel (%p96) target = $region21
    $region20: #{mlp_forward.3} parent=1 // pred_region
      %v99 = vld [vmem:[#allocation2] sm:$0xff]
      %v100 = vld [vmem:[#allocation2 + $0x8] sm:$0xff]
      %s101 = sld [smem:[#allocation3]]
      %v102 = vstv %s101
      %v103 = vmul.f32 %v99, %v102
      %v104 = vmul.f32 %v100, %v102
      %v105 = vpack.c.bf16 %v104, %v103
      %v107 = vunpack.c.l.b16 %v105
      %v108 = vunpack.c.h.b16 %v105
      %v109 = vpack.c.b16 %v107, %v107
      %v110 = vpack.c.b16 %v108, %v108
      %vm113 = vcmask 257024
      %114 = vst.msk [vmem:[#allocation4] sm:$0xf] %vm113, %v109
      %115 = vst.msk [vmem:[#allocation4 + $0x4] sm:$0xf] %vm113, %v110
    $region21: #{mlp_forward.3} parent=1 // pred_fallthru
      _
    // Predicated region
    $region22: #{mlp_forward.3} parent=1 // pred_check
      _
    $region23: #{mlp_forward.3} parent=1 // pred_check_branch
      %117 = sbr.rel (0) target = $region25
    $region24: #{mlp_forward.3} parent=1 // pred_region
      %s119 = ssub.s32 128, 128
      %120 = vsyncadd [#allocation5], %s119
      %s121 = sshll.u32 [#allocation4], 4
      %s122 = int_to_ptr.vmem [resolvable:$true] %s121
      %127 = dma.vmem_to_hbm [thread:$0]  %s122, 128, %s3, [#allocation5], 64, 64, 4
    $region25: #{mlp_forward.3} parent=1 // pred_fallthru
      _
    // Predicated region
    $region26: #{mlp_forward.3} parent=1 // pred_check
      _
    $region27: #{mlp_forward.3} parent=1 // pred_check_branch
      %129 = sbr.rel (0) target = $region29
    $region28: #{mlp_forward.3} parent=1 // pred_region
      %130 = dma.done [#allocation5], 128
    $region29: #{mlp_forward.3} parent=1 // pred_fallthru
      _
    %131 = vsyncpa [#allocation5], 1

// kernel: mlp_forward.2
$region0: #{mlp_forward.2}
  #allocation0 [shape = 'u32[]', space=smem, size = 0x4, offset = 0x4, fixed_abs, tag = 'smem constant byte address 0x4 - core index']
  #allocation1 [shape = 'u32[144,128]{1,0:T(1,128)}', space=vmem, size = 0x12000, scoped, tag = 'internal scratch']
  #allocation2 [shape = 'f32[16,128]{1,0:T(8,128)}', space=vmem, size = 0x2000, scoped, tag = 'scratch operand']
  #allocation3 [shape = 'f32[16,128]{1,0:T(8,128)}', space=vmem, size = 0x2000, scoped, tag = 'scratch operand']
  #allocation4 [shape = 'f32[1]{0:T(128)S(6)}', space=smem, size = 0x200, scoped, tag = 'scoped memory for mlp_forward.2']
  %s0 = inlined_call_operand.<no memory space> [shape: f32[1], index: 0, kind: input, shape index: {}]
  %s1 = inlined_call_operand.vmem [shape: bf16[16,32], index: 1, kind: input, shape index: {}]
  %s2 = inlined_call_operand.vmem [shape: bf16[256,32], index: 2, kind: input, shape index: {}, may-alias: {2,3}]
  %s3 = inlined_call_operand.vmem [shape: bf16[256,32], index: 3, kind: input, shape index: {}, may-alias: {2,3}]
  %s4 = inlined_call_operand.vmem [shape: bf16[16,128], index: 4, kind: output, shape index: {0}]
  %s5 = inlined_call_operand.vmem [shape: f32[8,128], index: 5, kind: output, shape index: {1}]
  %6 = xla_tuple %s4, %s5
  %s7 = sld [smem:[#allocation0]]
  $region42: #{mlp_forward.2} parent=0
    _
  %s9 = ssub.s32 1, %s7
  %s10 = scalar_select 0, %s9, %s7
  %11 = sst [smem:[#allocation4]] %s0
  // Predicated region
  $region2: #{mlp_forward.2} parent=0 // pred_check
    _
  $region3: #{mlp_forward.2} parent=0 // pred_check_branch
    %13 = sbr.rel (0) target = $region5
  $region4: #{mlp_forward.2} parent=0 // pred_region
    _
  $region5: #{mlp_forward.2} parent=0 // pred_fallthru
    _
  // Predicated region
  $region6: #{mlp_forward.2} parent=0 // pred_check
    _
  $region7: #{mlp_forward.2} parent=0 // pred_check_branch
    %15 = sbr.rel (0) target = $region9
  $region8: #{mlp_forward.2} parent=0 // pred_region
    _
  $region9: #{mlp_forward.2} parent=0 // pred_fallthru
    _
  // Predicated region
  $region10: #{mlp_forward.2} parent=0 // pred_check
    _
  $region11: #{mlp_forward.2} parent=0 // pred_check_branch
    %17 = sbr.rel (0) target = $region13
  $region12: #{mlp_forward.2} parent=0 // pred_region
    _
  $region13: #{mlp_forward.2} parent=0 // pred_fallthru
    _
  // Predicated region
  $region14: #{mlp_forward.2} parent=0 // pred_check
    _
  $region15: #{mlp_forward.2} parent=0 // pred_check_branch
    %19 = sbr.rel (0) target = $region17
  $region16: #{mlp_forward.2} parent=0 // pred_region
    %s20 = sadd.s32 0, 1
    %s21 = smul.u32 16, %s20
    %p22 = scmp.lt.s32.totalorder %s21, 31
    %s23 = scalar_select %p22, %s21, 31
    %s24 = smul.addr %s23, 4
    %s25 = scalar_lea.vmem %s3, %s24
    %s26 = sadd.s32 0, 1
    %s27 = smul.u32 16, %s26
  $region17: #{mlp_forward.2} parent=0 // pred_fallthru
    _
  %s28 = sadd.s32 0, 1
  %s29 = smul.u32 16, %s28
  %p30 = scmp.lt.s32.totalorder %s29, 31
  %s31 = scalar_select %p30, %s29, 31
  %s32 = smul.addr %s31, 4
  %s33 = scalar_lea.vmem %s3, %s32
  %s34 = sadd.s32 0, 1
  %s35 = smul.u32 16, %s34
  %p36 = scmp.lt.s32.totalorder %s35, 31
  %s37 = scalar_select %p36, %s35, 31
  %s38 = smul.addr %s37, 4
  %s39 = scalar_lea.vmem %s3, %s38
  %s40 = sadd.s32 0, 1
  %s41 = smul.u32 16, %s40
  %p43 = scmp.eq.s32.totalorder 0, 0
  // Predicated region
  $region18: #{mlp_forward.2} parent=0 // pred_check
    %p44 = pneg %p43
  $region19: #{mlp_forward.2} parent=0 // pred_check_branch
    %46 = sbr.rel (%p44) target = $region21
  $region20: #{mlp_forward.2} parent=0 // pred_region
    %47 = vst [vmem:[#allocation2] sm:$0xff] 0.0
    %48 = vst [vmem:[#allocation2 + $0x8] sm:$0xff] 0.0
    %49 = vst [vmem:[#allocation3] sm:$0xff] 0.0
    %50 = vst [vmem:[#allocation3 + $0x8] sm:$0xff] 0.0
  $region21: #{mlp_forward.2} parent=0 // pred_fallthru
    _
  %v51 = vld [vmem:[%s1] sm:$0xf]
  %v52 = vld [vmem:[%s1 + $0x4] sm:$0xf]
  %v53 = vld [vmem:[#allocation2] sm:$0xff]
  %v54 = vld [vmem:[#allocation2 + $0x8] sm:$0xff]
  %v55 = vld [vmem:[%s2] sm:$0xf]
  %v56 = vld [vmem:[%s2 + $0x4] sm:$0xf]
  %v57 = vld [vmem:[%s2 + $0x8] sm:$0xf]
  %v58 = vld [vmem:[%s2 + $0xc] sm:$0xf]
  %v59 = vld [vmem:[%s2 + $0x10] sm:$0xf]
  %v60 = vld [vmem:[%s2 + $0x14] sm:$0xf]
  %v61 = vld [vmem:[%s2 + $0x18] sm:$0xf]
  %v62 = vld [vmem:[%s2 + $0x1c] sm:$0xf]
  %v63 = vld [vmem:[%s2 + $0x20] sm:$0xf]
  %v64 = vld [vmem:[%s2 + $0x24] sm:$0xf]
  %v65 = vld [vmem:[%s2 + $0x28] sm:$0xf]
  %v66 = vld [vmem:[%s2 + $0x2c] sm:$0xf]
  %v67 = vld [vmem:[%s2 + $0x30] sm:$0xf]
  %v68 = vld [vmem:[%s2 + $0x34] sm:$0xf]
  %v69 = vld [vmem:[%s2 + $0x38] sm:$0xf]
  %v70 = vld [vmem:[%s2 + $0x3c] sm:$0xf]
  %v73 = vunpack.c.l.b16 %v51
  %v74 = vunpack.c.l.b16 %v52
  %v75 = vpack.c.b16 %v74, %v73
  %v92 = vunpack.c.l.b16 %v55
  %v93 = vunpack.c.l.b16 %v56
  %v94 = vunpack.c.l.b16 %v57
  %v95 = vunpack.c.l.b16 %v58
  %v96 = vunpack.c.l.b16 %v59
  %v97 = vunpack.c.l.b16 %v60
  %v98 = vunpack.c.l.b16 %v61
  %v99 = vunpack.c.l.b16 %v62
  %v100 = vunpack.c.l.b16 %v63
  %v101 = vunpack.c.l.b16 %v64
  %v102 = vunpack.c.l.b16 %v65
  %v103 = vunpack.c.l.b16 %v66
  %v104 = vunpack.c.l.b16 %v67
  %v105 = vunpack.c.l.b16 %v68
  %v106 = vunpack.c.l.b16 %v69
  %v107 = vunpack.c.l.b16 %v70
  %v108 = vpack.c.b16 %v93, %v92
  %v109 = vpack.c.b16 %v95, %v94
  %v110 = vpack.c.b16 %v97, %v96
  %v111 = vpack.c.b16 %v99, %v98
  %v112 = vpack.c.b16 %v101, %v100
  %v113 = vpack.c.b16 %v103, %v102
  %v114 = vpack.c.b16 %v105, %v104
  %v115 = vpack.c.b16 %v107, %v106
  %vm116 = vcmask 261120
  %v118 = vsel %vm116, %v75, 0
  %v121 = vsel %vm116, %v108, 0
  %v124 = vsel %vm116, %v109, 0
  %v127 = vsel %vm116, %v110, 0
  %v130 = vsel %vm116, %v111, 0
  %v133 = vsel %vm116, %v112, 0
  %v136 = vsel %vm116, %v113, 0
  %v139 = vsel %vm116, %v114, 0
  %v142 = vsel %vm116, %v115, 0
  %144 = vmatprep.subr.bf16.mxu0 0
  %145 = vmatpush1.bf16.xpose.msra.mxu0 %v121
  %146 = vmatprep.subr.bf16.mxu0 0
  %147 = vmatpush1.bf16.xpose.msra.mxu0 %v124
  %148 = vmatprep.subr.bf16.mxu0 0
  %149 = vmatpush1.bf16.xpose.msra.mxu0 %v127
  %150 = vmatprep.subr.bf16.mxu0 0
  %151 = vmatpush1.bf16.xpose.msra.mxu0 %v130
  %152 = vmatprep.subr.bf16.mxu0 0
  %153 = vmatpush1.bf16.xpose.msra.mxu0 %v133
  %154 = vmatprep.subr.bf16.mxu0 0
  %155 = vmatpush1.bf16.xpose.msra.mxu0 %v136
  %156 = vmatprep.subr.bf16.mxu0 0
  %157 = vmatpush1.bf16.xpose.msra.mxu0 %v139
  %158 = vmatprep.subr.bf16.mxu0 0
  %159 = vmatpush1.bf16.xpose.msra.mxu0 %v142
  %160 = vmatprep.subr.bf16.mxu0 0
  %161 = vmatpush1.bf16.xpose.msra.mxu0 0
  %162 = vmatprep.subr.bf16.mxu0 0
  %163 = vmatpush1.bf16.xpose.msra.mxu0 0
  %164 = vmatprep.subr.bf16.mxu0 0
  %165 = vmatpush1.bf16.xpose.msra.mxu0 0
  %166 = vmatprep.subr.bf16.mxu0 0
  %167 = vmatpush1.bf16.xpose.msra.mxu0 0
  %168 = vmatprep.subr.bf16.mxu0 0
  %169 = vmatpush1.bf16.xpose.msra.mxu0 0
  %170 = vmatprep.subr.bf16.mxu0 0
  %171 = vmatpush1.bf16.xpose.msra.mxu0 0
  %172 = vmatprep.subr.bf16.mxu0 0
  %173 = vmatpush1.bf16.xpose.msra.mxu0 0
  %174 = vmatprep.subr.bf16.mxu0 0
  %175 = vmatpush1.bf16.xpose.msra.mxu0 0
  %176 = vmatprep.mubr.bf16.mxu0 0
  %177 = vmatmul.mubr.bf16.gmra.mrb[0].mxu0 %v118
  %v178 = vpop.f32.mrb[0].mxu0
  %v179 = vadd.f32 0.0, %v178
  %v180 = vpop.f32.mrb[0].mxu0
  %v181 = vpop.f32.mrb[0].mxu0
  %v182 = vadd.f32 0.0, %v181
  %v183 = vpop.f32.mrb[0].mxu0
  %184 = vdwg.mxu0
  %v185 = vadd.f32 %v53, %v179
  %v186 = vadd.f32 %v54, %v182
  %187 = vst [vmem:[#allocation2] sm:$0xff] %v185
  %188 = vst [vmem:[#allocation2 + $0x8] sm:$0xff] %v186
  %v189 = vld [vmem:[#allocation3] sm:$0xff]
  %v190 = vld [vmem:[#allocation3 + $0x8] sm:$0xff]
  %v191 = vld [vmem:[%s39] sm:$0xf]
  %v192 = vld [vmem:[%s39 + $0x4] sm:$0xf]
  %v193 = vld [vmem:[%s39 + $0x8] sm:$0xf]
  %v194 = vld [vmem:[%s39 + $0xc] sm:$0xf]
  %v195 = vld [vmem:[%s39 + $0x10] sm:$0xf]
  %v196 = vld [vmem:[%s39 + $0x14] sm:$0xf]
  %v197 = vld [vmem:[%s39 + $0x18] sm:$0xf]
  %v198 = vld [vmem:[%s39 + $0x1c] sm:$0xf]
  %v199 = vld [vmem:[%s39 + $0x20] sm:$0xf]
  %v200 = vld [vmem:[%s39 + $0x24] sm:$0xf]
  %v201 = vld [vmem:[%s39 + $0x28] sm:$0xf]
  %v202 = vld [vmem:[%s39 + $0x2c] sm:$0xf]
  %v203 = vld [vmem:[%s39 + $0x30] sm:$0xf]
  %v204 = vld [vmem:[%s39 + $0x34] sm:$0xf]
  %v205 = vld [vmem:[%s39 + $0x38] sm:$0xf]
  %v206 = vld [vmem:[%s39 + $0x3c] sm:$0xf]
  %v223 = vunpack.c.l.b16 %v191
  %v224 = vunpack.c.l.b16 %v192
  %v225 = vunpack.c.l.b16 %v193
  %v226 = vunpack.c.l.b16 %v194
  %v227 = vunpack.c.l.b16 %v195
  %v228 = vunpack.c.l.b16 %v196
  %v229 = vunpack.c.l.b16 %v197
  %v230 = vunpack.c.l.b16 %v198
  %v231 = vunpack.c.l.b16 %v199
  %v232 = vunpack.c.l.b16 %v200
  %v233 = vunpack.c.l.b16 %v201
  %v234 = vunpack.c.l.b16 %v202
  %v235 = vunpack.c.l.b16 %v203
  %v236 = vunpack.c.l.b16 %v204
  %v237 = vunpack.c.l.b16 %v205
  %v238 = vunpack.c.l.b16 %v206
  %v239 = vpack.c.b16 %v224, %v223
  %v240 = vpack.c.b16 %v226, %v225
  %v241 = vpack.c.b16 %v228, %v227
  %v242 = vpack.c.b16 %v230, %v229
  %v243 = vpack.c.b16 %v232, %v231
  %v244 = vpack.c.b16 %v234, %v233
  %v245 = vpack.c.b16 %v236, %v235
  %v246 = vpack.c.b16 %v238, %v237
  %v248 = vsel %vm116, %v239, 0
  %v251 = vsel %vm116, %v240, 0
  %v254 = vsel %vm116, %v241, 0
  %v257 = vsel %vm116, %v242, 0
  %v260 = vsel %vm116, %v243, 0
  %v263 = vsel %vm116, %v244, 0
  %v266 = vsel %vm116, %v245, 0
  %v269 = vsel %vm116, %v246, 0
  %271 = vmatprep.subr.bf16.mxu0 0
  %272 = vmatpush1.bf16.xpose.msra.mxu0 %v248
  %273 = vmatprep.subr.bf16.mxu0 0
  %274 = vmatpush1.bf16.xpose.msra.mxu0 %v251
  %275 = vmatprep.subr.bf16.mxu0 0
  %276 = vmatpush1.bf16.xpose.msra.mxu0 %v254
  %277 = vmatprep.subr.bf16.mxu0 0
  %278 = vmatpush1.bf16.xpose.msra.mxu0 %v257
  %279 = vmatprep.subr.bf16.mxu0 0
  %280 = vmatpush1.bf16.xpose.msra.mxu0 %v260
  %281 = vmatprep.subr.bf16.mxu0 0
  %282 = vmatpush1.bf16.xpose.msra.mxu0 %v263
  %283 = vmatprep.subr.bf16.mxu0 0
  %284 = vmatpush1.bf16.xpose.msra.mxu0 %v266
  %285 = vmatprep.subr.bf16.mxu0 0
  %286 = vmatpush1.bf16.xpose.msra.mxu0 %v269
  %287 = vmatprep.subr.bf16.mxu0 0
  %288 = vmatpush1.bf16.xpose.msra.mxu0 0
  %289 = vmatprep.subr.bf16.mxu0 0
  %290 = vmatpush1.bf16.xpose.msra.mxu0 0
  %291 = vmatprep.subr.bf16.mxu0 0
  %292 = vmatpush1.bf16.xpose.msra.mxu0 0
  %293 = vmatprep.subr.bf16.mxu0 0
  %294 = vmatpush1.bf16.xpose.msra.mxu0 0
  %295 = vmatprep.subr.bf16.mxu0 0
  %296 = vmatpush1.bf16.xpose.msra.mxu0 0
  %297 = vmatprep.subr.bf16.mxu0 0
  %298 = vmatpush1.bf16.xpose.msra.mxu0 0
  %299 = vmatprep.subr.bf16.mxu0 0
  %300 = vmatpush1.bf16.xpose.msra.mxu0 0
  %301 = vmatprep.subr.bf16.mxu0 0
  %302 = vmatpush1.bf16.xpose.msra.mxu0 0
  %303 = vmatprep.mubr.bf16.mxu0 0
  %304 = vmatmul.mubr.bf16.gmra.mrb[0].mxu0 %v118
  %v305 = vpop.f32.mrb[0].mxu0
  %v306 = vadd.f32 0.0, %v305
  %v307 = vpop.f32.mrb[0].mxu0
  %v308 = vpop.f32.mrb[0].mxu0
  %v309 = vadd.f32 0.0, %v308
  %v310 = vpop.f32.mrb[0].mxu0
  %311 = vdwg.mxu0
  %v312 = vadd.f32 %v189, %v306
  %v313 = vadd.f32 %v190, %v309
  %314 = vst [vmem:[#allocation3] sm:$0xff] %v312
  %315 = vst [vmem:[#allocation3 + $0x8] sm:$0xff] %v313
  // Predicated region
  $region22: #{mlp_forward.2} parent=0 // pred_check
    %p316 = pneg %p43
  $region23: #{mlp_forward.2} parent=0 // pred_check_branch
    %318 = sbr.rel (%p316) target = $region25
  $region24: #{mlp_forward.2} parent=0 // pred_region
    %s319 = sld [smem:[#allocation4]]
    %v320 = vld [vmem:[#allocation2] sm:$0xff]
    %v321 = vld [vmem:[#allocation2 + $0x8] sm:$0xff]
    %v322 = vstv %s319
    %v323 = vmul.f32 %v320, %v322
    %v324 = vmul.f32 %v321, %v322
    %v325 = vld [vmem:[#allocation3] sm:$0xff]
    %v326 = vld [vmem:[#allocation3 + $0x8] sm:$0xff]
    %v327 = vmul.f32 %v325, %v322
    %v328 = vmul.f32 %v326, %v322
    %v329 = vxor.u32 %v323, 2147483648
    %v330 = vxor.u32 %v324, 2147483648
    %v331 = vmul.f32 %v329, 1.442695
    %v332 = vpow.pop %v331
    %v333 = vmul.f32 %v330, 1.442695
    %v334 = vpow.pop %v333
    %v335 = vadd.f32 %v332, 1.0
    %v336 = vadd.f32 %v334, 1.0
    %v337 = vrcp.pop %v335
    %v338 = vmul.f32 1.0, %v337
    %v339 = vrcp.pop %v336
    %v340 = vmul.f32 1.0, %v339
    %v341 = vmul.f32 %v323, %v338
    %v342 = vmul.f32 %v324, %v340
    %v343 = vmul.f32 %v341, %v327
    %v344 = vmul.f32 %v342, %v328
    %v345 = vpack.c.bf16 %v344, %v343
    %v347 = vunpack.c.l.b16 %v345
    %v348 = vunpack.c.h.b16 %v345
    %v349 = vpack.c.b16 %v347, %v347
    %v350 = vpack.c.b16 %v348, %v348
    %353 = vst [vmem:[%s4] sm:$0xf] %v349
    %354 = vst [vmem:[%s4 + $0x4] sm:$0xf] %v350
    %v355 = vunpack.c.l.bf16 %v345
    %v356 = vunpack.c.h.bf16 %v345
    %v357 = vand.u32 2147483647, %v355
    %v358 = vand.u32 2147483647, %v356
    %v359 = vmax.f32 %v357, %v358
    %360 = vmax.xlane.f32.xlu0 %v359
    %v361 = vpop.xlane.xlu0 %360
    %v362 = vrot.slane %v361, 4
    %v363 = vmax.f32 %v361, %v362
    %v364 = vrot.slane %v363, 2
    %v365 = vmax.f32 %v363, %v364
    %v366 = vrot.slane %v365, 1
    %v367 = vmax.f32 %v365, %v366
    %s368 = vtos %v367
    %v369 = vstv %s368
    %370 = vst [vmem:[%s5] sm:$0xff] %v369
  $region25: #{mlp_forward.2} parent=0 // pred_fallthru
    _
  // Predicated region
  $region26: #{mlp_forward.2} parent=0 // pred_check
    _
  $region27: #{mlp_forward.2} parent=0 // pred_check_branch
    %372 = sbr.rel (0) target = $region29
  $region28: #{mlp_forward.2} parent=0 // pred_region
    _
  $region29: #{mlp_forward.2} parent=0 // pred_fallthru
    _
  // Predicated region
  $region30: #{mlp_forward.2} parent=0 // pred_check
    _
  $region31: #{mlp_forward.2} parent=0 // pred_check_branch
    %374 = sbr.rel (0) target = $region33
  $region32: #{mlp_forward.2} parent=0 // pred_region
    _
  $region33: #{mlp_forward.2} parent=0 // pred_fallthru
    _
  // Predicated region
  $region34: #{mlp_forward.2} parent=0 // pred_check
    _
  $region35: #{mlp_forward.2} parent=0 // pred_check_branch
    %376 = sbr.rel (0) target = $region37
  $region36: #{mlp_forward.2} parent=0 // pred_region
    _
  $region37: #{mlp_forward.2} parent=0 // pred_fallthru
    _
  // Predicated region
  $region38: #{mlp_forward.2} parent=0 // pred_check
    _
  $region39: #{mlp_forward.2} parent=0 // pred_check_branch
    %378 = sbr.rel (0) target = $region41
  $region40: #{mlp_forward.2} parent=0 // pred_region
    _
  $region41: #{mlp_forward.2} parent=0 // pred_fallthru
    _

</llo_original>
